<compile_context>
chip_gen: v6e
topology: v6e:2x2x1
jax: 0.10.0
libtpu: 0.0.40
codegen_flags: <defaults>
</compile_context>

<pallas_src>
import functools

import jax
import jax.numpy as jnp
from jax.experimental import pallas as pl
from jax.experimental.pallas import tpu as pltpu


# ----------------------------- Pallas kernels -----------------------------

def _dropout_maxpool_kernel(x_ref, o_ref, *, drop_rate, seed, H, W, C, hr):
    # x_ref: (1, 2*hr, W, C) NHWC row chunk; o_ref: (1, hr, W//2, C)
    xb = x_ref[...].astype(jnp.float32)
    if drop_rate > 0.0:
        n = pl.program_id(0)
        t = pl.program_id(1)
        # unique global element counter per element of this block (no per-tile reseeding)
        base = (n * H + t * (2 * hr)) * (W * C)
        shape = xb.shape
        li = (jax.lax.broadcasted_iota(jnp.int32, shape, 1) * (W * C)
              + jax.lax.broadcasted_iota(jnp.int32, shape, 2) * C
              + jax.lax.broadcasted_iota(jnp.int32, shape, 3))
        u = (li + base).astype(jnp.uint32) + jnp.uint32((seed * 2654435761) & 0xFFFFFFFF)
        # fmix-style integer hash -> uniform u32 per element (plain VPU int ops)
        u = u * jnp.uint32(0x9E3779B1)
        u = u ^ (u >> 15)
        u = u * jnp.uint32(0x85EBCA77)
        u = u ^ (u >> 13)
        u = u * jnp.uint32(0xC2B2AE3D)
        u = u ^ (u >> 16)
        thr = min(int(round(drop_rate * 4294967296.0)), 4294967295)
        keep = u >= jnp.uint32(thr)                      # P(keep) = 1 - drop_rate
        xb = jnp.where(keep, xb * (1.0 / (1.0 - drop_rate)), 0.0)
    # 2x2 max pool: max over H-pairs, then over W-pairs.
    xb = xb[0].reshape(hr, 2, W, C)
    m = jnp.maximum(xb[:, 0], xb[:, 1])                  # (hr, W, C)
    m = m.reshape(hr, W // 2, 2, C)
    m = jnp.maximum(m[:, :, 0], m[:, :, 1])              # (hr, W//2, C)
    o_ref[0] = m.astype(o_ref.dtype)


def _conv_stats_kernel(xp_ref, w_ref, g_ref, beta_ref, y_ref, ss_ref,
                       xbuf, sem, stat_ref, *, th, W, Cin, Cout, eps, m_total):
    # xp_ref : (N, H+2, W+2, Cin) padded input, memory_space=ANY -> manual halo DMA
    # w_ref  : (9, Cin, Cout) 3x3 weights (VMEM resident)
    # y_ref  : (1, th, W, Cout) raw conv output tile
    # ss_ref : (2, Cout) finalized (scale, shift), written on the last grid step
    # xbuf   : (2, th+2, W+2, Cin) double-buffered halo strips; sem: DMA sems; stat: (2, Cout)
    n = pl.program_id(0)
    t = pl.program_id(1)
    ht = pl.num_programs(1)
    nsteps = pl.num_programs(0) * ht
    step = n * ht + t
    slot = step & 1

    def start_fetch(bn, bt, s):
        pltpu.make_async_copy(
            xp_ref.at[bn, pl.ds(bt * th, th + 2), :, :],
            xbuf.at[s], sem.at[s]).start()

    @pl.when(step == 0)
    def _():
        stat_ref[...] = jnp.zeros_like(stat_ref)
        start_fetch(n, t, 0)                              # prime the pipeline

    # wait for this step's halo strip
    pltpu.make_async_copy(
        xp_ref.at[n, pl.ds(t * th, th + 2), :, :], xbuf.at[slot], sem.at[slot]).wait()

    # prefetch the next strip into the other slot while we compute
    @pl.when(step + 1 < nsteps)
    def _():
        nxt = step + 1
        start_fetch(nxt // ht, nxt % ht, 1 - slot)

    xs = xbuf[slot]                                       # (th+2, W+2, Cin)
    acc = jnp.zeros((th * W, Cout), jnp.float32)
    for ky in range(3):
        for kx in range(3):
            tap = xs[ky:ky + th, kx:kx + W, :].reshape(th * W, Cin)
            acc = acc + jnp.dot(tap, w_ref[ky * 3 + kx],
                                preferred_element_type=jnp.float32)
    # NOTE: conv bias intentionally omitted -- it cancels exactly under training-mode
    # BatchNorm ((x+b) - mean(x+b) == x - mean(x)).

    stat_ref[0:1, :] += jnp.sum(acc, axis=0, keepdims=True)
    stat_ref[1:2, :] += jnp.sum(acc * acc, axis=0, keepdims=True)
    y_ref[...] = acc.reshape(y_ref.shape).astype(y_ref.dtype)

    @pl.when(step == nsteps - 1)
    def _():
        inv_m = 1.0 / m_total
        mean = stat_ref[0:1, :] * inv_m
        var = stat_ref[1:2, :] * inv_m - mean * mean      # E[x^2] - E[x]^2, single pass
        scale = g_ref[...] * jax.lax.rsqrt(var + eps)
        ss_ref[0:1, :] = scale
        ss_ref[1:2, :] = beta_ref[...] - mean * scale


def _bn_relu_kernel(y_ref, ss_ref, o_ref):
    # y_ref: (tm, Cout)  ss_ref: (2, Cout) = (scale, shift)
    y = y_ref[...]
    o_ref[...] = jnp.maximum(y * ss_ref[0:1, :] + ss_ref[1:2, :], 0.0).astype(o_ref.dtype)


# ------------------------------ JAX wrappers -------------------------------

def _pick_row_tile(H, W, Cin, target_bytes=4 << 20):
    """Output-row tile so the in-kernel working set (halo strip + tap slabs) stays ~target."""
    pix = max(1, target_bytes // max(1, 9 * Cin * 4))
    th = max(1, min(H, pix // max(W, 1)))
    while H % th:
        th -= 1
    return th


def _pick_bn_tile(M, target=1024):
    if M <= target:
        return M
    t = target - (target % 8)
    while t >= 8:
        if M % t == 0:
            return t
        t -= 8
    return M


def dropout_maxpool(x, drop_rate, seed):
    # x: (N, H, W, C) NHWC, H and W even
    N, H, W, C = x.shape
    H2, W2 = H // 2, W // 2
    # largest divisor of H2 keeping the (1, 2*hr, W, C) input tile under ~2 MiB
    budget_rows = max(1, (2 << 20) // max(1, 2 * W * C * 4))
    hr = min(H2, budget_rows)
    while H2 % hr:
        hr -= 1
    kernel = functools.partial(_dropout_maxpool_kernel, drop_rate=float(drop_rate),
                               seed=int(seed), H=H, W=W, C=C, hr=hr)
    return pl.pallas_call(
        kernel,
        grid=(N, H2 // hr),
        in_specs=[pl.BlockSpec((1, 2 * hr, W, C), lambda n, t: (n, t, 0, 0))],
        out_specs=pl.BlockSpec((1, hr, W2, C), lambda n, t: (n, t, 0, 0)),
        out_shape=jax.ShapeDtypeStruct((N, H2, W2, C), jnp.float32),
        compiler_params=pltpu.CompilerParams(
            dimension_semantics=("parallel", "parallel")),
    )(x)


def conv3x3_stats(x, w, gamma, beta, eps=1e-5):
    """Pass A: 3x3 SAME conv (no bias) + global BN-stat accumulation.

    Returns (raw conv activation (N,H,W,Cout) f32, (2,Cout) [scale; shift])."""
    N, H, W, Cin = x.shape
    Cout = w.shape[-1]
    xp = jnp.pad(x, ((0, 0), (1, 1), (1, 1), (0, 0)))     # single cheap pad, no im2col
    th = _pick_row_tile(H, W, Cin)
    HT = H // th
    wf = w.reshape(9, Cin, Cout)

    # per-tile VMEM budget: halo double-buffer + pipelined out tile + weights + live regs
    halo = 2 * (th + 2) * (W + 2) * Cin * 4
    ytile = 2 * th * W * Cout * 4
    wbytes = 2 * 9 * Cin * Cout * 4
    live = (th + 2) * (W + 2) * Cin * 4 + th * W * (Cin + 2 * Cout) * 4
    vmem_limit = int(min(max(2 * (halo + ytile + wbytes + live), 16 << 20), 48 << 20))

    kernel = functools.partial(_conv_stats_kernel, th=th, W=W, Cin=Cin, Cout=Cout,
                               eps=float(eps), m_total=float(N * H * W))
    y_raw, ss = pl.pallas_call(
        kernel,
        grid=(N, HT),
        in_specs=[
            pl.BlockSpec(memory_space=pl.ANY),                      # padded input stays in HBM
            pl.BlockSpec((9, Cin, Cout), lambda n, t: (0, 0, 0)),   # weights (resident)
            pl.BlockSpec((1, Cout), lambda n, t: (0, 0)),           # gamma
            pl.BlockSpec((1, Cout), lambda n, t: (0, 0)),           # beta
        ],
        out_specs=[
            pl.BlockSpec((1, th, W, Cout), lambda n, t: (n, t, 0, 0)),
            pl.BlockSpec((2, Cout), lambda n, t: (0, 0)),           # resident scale/shift out
        ],
        out_shape=[
            jax.ShapeDtypeStruct((N, H, W, Cout), jnp.float32),
            jax.ShapeDtypeStruct((2, Cout), jnp.float32),
        ],
        scratch_shapes=[
            pltpu.VMEM((2, th + 2, W + 2, Cin), jnp.float32),       # halo double buffer
            pltpu.SemaphoreType.DMA((2,)),
            pltpu.VMEM((2, Cout), jnp.float32),                     # sum / sum-of-squares
        ],
        compiler_params=pltpu.CompilerParams(
            dimension_semantics=("arbitrary", "arbitrary"),         # global-stat accumulation
            vmem_limit_bytes=vmem_limit),
    )(xp, wf, gamma.reshape(1, Cout), beta.reshape(1, Cout))
    return y_raw, ss


def bn_relu(y_raw, ss):
    """Pass B: y * scale + shift, ReLU -- fully parallel tiles over the row axis."""
    N, H, W, Cout = y_raw.shape
    M = N * H * W
    tm = _pick_bn_tile(M)
    y2 = y_raw.reshape(M, Cout)
    out = pl.pallas_call(
        _bn_relu_kernel,
        grid=(M // tm,),
        in_specs=[pl.BlockSpec((tm, Cout), lambda i: (i, 0)),
                  pl.BlockSpec((2, Cout), lambda i: (0, 0))],
        out_specs=pl.BlockSpec((tm, Cout), lambda i: (i, 0)),
        out_shape=jax.ShapeDtypeStruct((M, Cout), jnp.float32),
        compiler_params=pltpu.CompilerParams(dimension_semantics=("parallel",)),
    )(y2, ss)
    return out.reshape(N, H, W, Cout)


def down_forward(x_nchw, params, drop_rate, seed=0):
    """Down.forward: [dropout] -> maxpool2d(2) -> (conv3x3+BN+ReLU) x 2.  NCHW in/out.

    Conv biases (params['b1'], params['b2']) are not fed to the kernels: under
    training-mode BatchNorm they cancel exactly."""
    x = jnp.transpose(x_nchw, (0, 2, 3, 1))               # NCHW -> NHWC (layout plumbing)
    x = dropout_maxpool(x, drop_rate, seed)
    y, ss = conv3x3_stats(x, params["w1"], params["g1"], params["be1"])
    x = bn_relu(y, ss)
    y, ss = conv3x3_stats(x, params["w2"], params["g2"], params["be2"])
    x = bn_relu(y, ss)
    return jnp.transpose(x, (0, 3, 1, 2))                 # NHWC -> NCHW


# ------------------------------ reference (pure JAX) ------------------------------

def _ref_conv_bn_relu(x, w, b, gamma, beta, eps=1e-5):
    y = jax.lax.conv_general_dilated(
        x, w, (1, 1), "SAME", dimension_numbers=("NHWC", "HWIO", "NHWC"))
    y = y + b                                   # bias included here; cancels under BN
    mean = y.mean(axis=(0, 1, 2), keepdims=True)
    var = ((y - mean) ** 2).mean(axis=(0, 1, 2), keepdims=True)
    y = (y - mean) * jax.lax.rsqrt(var + eps) * gamma + beta
    return jnp.maximum(y, 0.0)


def _ref_down_nodrop(x_nchw, params):
    x = jnp.transpose(x_nchw, (0, 2, 3, 1))
    N, H, W, C = x.shape
    xp = x.reshape(N, H // 2, 2, W // 2, 2, C).max(axis=(2, 4))
    y = _ref_conv_bn_relu(xp, params["w1"], params["b1"], params["g1"], params["be1"])
    y = _ref_conv_bn_relu(y, params["w2"], params["b2"], params["g2"], params["be2"])
    return jnp.transpose(y, (0, 3, 1, 2))


# --------------------------------- main ---------------------------------

def _init_params(key, cin, cout):
    k1, k2, k3, k4 = jax.random.split(key, 4)
    return {
        "w1": 0.1 * jax.random.normal(k1, (3, 3, cin, cout), jnp.float32),   # HWIO
        "b1": 0.05 * jax.random.normal(k2, (cout,), jnp.float32),
        "g1": jnp.ones((cout,), jnp.float32),
        "be1": jnp.zeros((cout,), jnp.float32),
        "w2": 0.1 * jax.random.normal(k3, (3, 3, cout, cout), jnp.float32),
        "b2": 0.05 * jax.random.normal(k4, (cout,), jnp.float32),
        "g2": jnp.ones((cout,), jnp.float32),
        "be2": jnp.zeros((cout,), jnp.float32),
    }


if __name__ == "__main__":
    N, Cin, Cout, H, W = 2, 4, 8, 16, 16
    key = jax.random.PRNGKey(0)
    kx, kp = jax.random.split(key)
    x = jax.random.normal(kx, (N, Cin, H, W), jnp.float32)   # NCHW, as in the torch module
    params = _init_params(kp, Cin, Cout)

    # deterministic path (drop_rate = 0) vs pure-JAX reference (reference keeps the conv
    # bias, kernels drop it -> verifies the exact cancellation under training-mode BN)
    out0 = jax.block_until_ready(down_forward(x, params, drop_rate=0.0))
    ref0 = jax.block_until_ready(_ref_down_nodrop(x, params))
    assert out0.shape == (N, Cout, H // 2, W // 2)
    max_err = float(jnp.max(jnp.abs(out0 - ref0)))
    assert jnp.allclose(out0, ref0, atol=5e-4, rtol=5e-4), max_err

    # dropout-enabled path (Down(drop_rate=0.25)); mask from the in-kernel counter hash
    out1 = jax.block_until_ready(down_forward(x, params, drop_rate=0.25, seed=42))
    assert out1.shape == (N, Cout, H // 2, W // 2)
    assert bool(jnp.all(jnp.isfinite(out1)))

    print("KERNEL_OK")
</pallas_src>

<mosaic_0001>
module attributes {stable_mosaic.version = 11 : i64} {
  func.func @_dropout_maxpool_kernel(%arg0: i32, %arg1: i32, %arg2: memref<1x16x16x4xf32, #tpu.memory_space<vmem>>, %arg3: memref<1x8x8x4xf32, #tpu.memory_space<vmem>>) attributes {dimension_semantics = [#tpu.dimension_semantics<parallel>, #tpu.dimension_semantics<parallel>], iteration_bounds = array<i64: 2, 1>, scalar_prefetch = 0 : i64, scratch_operands = 0 : i64, tpu.core_type = #tpu.core_type<tc>, window_params = [{transform_indices = @transform_0, window_bounds = array<i64: 1, 16, 16, 4>}, {transform_indices = @transform_1, window_bounds = array<i64: 1, 8, 8, 4>}]} {
    %c0 = arith.constant 0 : index
    %c0_0 = arith.constant 0 : index
    %c0_1 = arith.constant 0 : index
    %c0_2 = arith.constant 0 : index
    %0 = vector.load %arg2[%c0, %c0_0, %c0_1, %c0_2] : memref<1x16x16x4xf32, #tpu.memory_space<vmem>>, vector<1x16x16x4xf32>
    %1 = vector.shape_cast %0 : vector<1x16x16x4xf32> to vector<16x16x4xf32>
    %2 = vector.shape_cast %1 : vector<16x16x4xf32> to vector<8x2x16x4xf32>
    %3 = vector.extract_strided_slice %2 {offsets = [0, 0, 0, 0], sizes = [8, 1, 16, 4], strides = [1, 1, 1, 1]} : vector<8x2x16x4xf32> to vector<8x1x16x4xf32>
    %4 = vector.shape_cast %3 : vector<8x1x16x4xf32> to vector<8x16x4xf32>
    %5 = vector.extract_strided_slice %2 {offsets = [0, 1, 0, 0], sizes = [8, 1, 16, 4], strides = [1, 1, 1, 1]} : vector<8x2x16x4xf32> to vector<8x1x16x4xf32>
    %6 = vector.shape_cast %5 : vector<8x1x16x4xf32> to vector<8x16x4xf32>
    %7 = arith.maximumf %4, %6 : vector<8x16x4xf32>
    %8 = vector.shape_cast %7 : vector<8x16x4xf32> to vector<8x8x2x4xf32>
    %9 = vector.extract_strided_slice %8 {offsets = [0, 0, 0, 0], sizes = [8, 8, 1, 4], strides = [1, 1, 1, 1]} : vector<8x8x2x4xf32> to vector<8x8x1x4xf32>
    %10 = vector.shape_cast %9 : vector<8x8x1x4xf32> to vector<8x8x4xf32>
    %11 = vector.extract_strided_slice %8 {offsets = [0, 0, 1, 0], sizes = [8, 8, 1, 4], strides = [1, 1, 1, 1]} : vector<8x8x2x4xf32> to vector<8x8x1x4xf32>
    %12 = vector.shape_cast %11 : vector<8x8x1x4xf32> to vector<8x8x4xf32>
    %13 = arith.maximumf %10, %12 : vector<8x8x4xf32>
    %c0_3 = arith.constant 0 : index
    %c0_4 = arith.constant 0 : index
    %c0_5 = arith.constant 0 : index
    %c0_6 = arith.constant 0 : index
    %14 = vector.load %arg3[%c0_3, %c0_4, %c0_5, %c0_6] : memref<1x8x8x4xf32, #tpu.memory_space<vmem>>, vector<1x8x8x4xf32>
    %15 = vector.shape_cast %14 : vector<1x8x8x4xf32> to vector<8x8x4xf32>
    %16 = vector.shape_cast %13 : vector<8x8x4xf32> to vector<1x8x8x4xf32>
    tpu.vector_store %arg3[%c0_3, %c0_4, %c0_5, %c0_6], %16 {strides = array<i32>} : memref<1x8x8x4xf32, #tpu.memory_space<vmem>>, vector<1x8x8x4xf32>,
    return
  }
  func.func @transform_0(%arg0: i32, %arg1: i32) -> (i32, i32, i32, i32) {
    %c0_i32 = arith.constant 0 : i32
    %c0_i32_0 = arith.constant 0 : i32
    %c0_i32_1 = arith.constant 0 : i32
    return %arg0, %arg1, %c0_i32, %c0_i32_0 : i32, i32, i32, i32
  }
  func.func @transform_1(%arg0: i32, %arg1: i32) -> (i32, i32, i32, i32) {
    %c0_i32 = arith.constant 0 : i32
    %c0_i32_0 = arith.constant 0 : i32
    %c0_i32_1 = arith.constant 0 : i32
    return %arg0, %arg1, %c0_i32, %c0_i32_0 : i32, i32, i32, i32
  }
}

</mosaic_0001>

<llo_original>
// kernel: tpu_custom_call.1
$region0: #{tpu_custom_call.1}
  #allocation0 [shape = 'u32[]', space=smem, size = 0x4, offset = 0x4, fixed_abs, tag = 'smem constant byte address 0x4 - core index']
  #allocation1 [shape = 'u32[144,128]{1,0:T(1,128)}', space=vmem, size = 0x12000, scoped, tag = 'internal scratch']
  %s0 = inlined_call_operand.vmem [shape: f32[2,16,16,4], index: 0, kind: input, shape index: {}]
  %s1 = inlined_call_operand.vmem [shape: f32[2,8,8,4], index: 1, kind: output, shape index: {}]
  %s2 = sld [smem:[#allocation0]]
  $region37: #{tpu_custom_call.1} parent=0
    _
  %s4 = ssub.s32 1, %s2
  %s5 = scalar_select 0, %s4, %s2
  loop: start=0, step=1, limit=4
  $region2: #{tpu_custom_call.1} parent=0 // loop_pre_header
    _
  $region3: #{tpu_custom_call.1} parent=0 // loop_header
    %s7 = sphi 0, %s11
    %p8 = scmp.ge.s32.totalorder %s7, 4
    %s14 = sphi 0, %s26
    %s15 = sphi 0, %s22
    %s16 = sphi 0, %s14
    %s17 = sphi 0, %s15
    %s18 = sphi 0, %s16
    %s19 = sphi 0, %s17
    %s31 = sphi 0, %s33
    %s34 = sphi 0, %s31
    %s35 = sphi 0, %s34
    %s51 = sphi 0, %s35
    %s59 = sphi 0, %s61
    %s62 = sphi 0, %s59
    %s63 = sphi 0, %s62
    %s79 = sphi 0, %s63
  $region4: #{tpu_custom_call.1} parent=0 // loop_header_branch
    %10 = sbr.rel (%p8) target = $region8
  $region5: #{tpu_custom_call.1} parent=0 // loop_body
    %s12 = ssub.s32 %s7, 1
    %s13 = ssub.s32 %s7, 2
    %s20 = sadd.s32 1, %s15
    %p21 = scmp.ge.s32.totalorder %s20, 1
    %s22 = scalar_select %p21, 0, %s20
    %s23 = sadd.s32 1, %s14
    %s24 = scalar_select %p21, %s23, %s14
    %p25 = scmp.ge.s32.totalorder %s24, 2
    %s26 = scalar_select %p25, 0, %s24
    %s27 = ssub.s32 %s14, %s26
    %s28 = ssub.s32 %s15, %s22
    %s29 = sor.u32 %s27, %s28
    %p30 = scmp.eq.s32.totalorder %s29, 0
    %s32 = sadd.s32 %s31, 1
    %s33 = scalar_select %p30, %s31, %s32
    %p36 = pneg %p30
    %p37 = scmp.eq.s32.totalorder %s7, 1
    %p38 = por %p36, %p37
    %p39 = scmp.ne.s32.totalorder %s31, %s34
    %p40 = scmp.eq.s32.totalorder %s7, 0
    %p41 = por %p39, %p40
    %p42 = scmp.ne.s32.totalorder %s31, %s34
    %p43 = scmp.eq.s32.totalorder %s12, 1
    %p44 = por %p42, %p43
    %p45 = scmp.ne.s32.totalorder %s34, %s35
    %p46 = scmp.eq.s32.totalorder %s12, 0
    %p47 = por %p45, %p46
    %p48 = scmp.ne.s32.totalorder %s34, %s35
    %p49 = scmp.eq.s32.totalorder %s13, 1
    %p50 = por %p48, %p49
    %p52 = scmp.ne.s32.totalorder %s35, %s51
    %p53 = scmp.eq.s32.totalorder %s13, 0
    %p54 = por %p52, %p53
    %s55 = ssub.s32 %s14, %s26
    %s56 = ssub.s32 %s15, %s22
    %s57 = sor.u32 %s55, %s56
    %p58 = scmp.eq.s32.totalorder %s57, 0
    %s60 = sadd.s32 %s59, 1
    %s61 = scalar_select %p58, %s59, %s60
    %p64 = pneg %p58
    %p65 = scmp.eq.s32.totalorder %s7, 1
    %p66 = por %p64, %p65
    %p67 = scmp.ne.s32.totalorder %s59, %s62
    %p68 = scmp.eq.s32.totalorder %s7, 0
    %p69 = por %p67, %p68
    %p70 = scmp.ne.s32.totalorder %s59, %s62
    %p71 = scmp.eq.s32.totalorder %s12, 1
    %p72 = por %p70, %p71
    %p73 = scmp.ne.s32.totalorder %s62, %s63
    %p74 = scmp.eq.s32.totalorder %s12, 0
    %p75 = por %p73, %p74
    %p76 = scmp.ne.s32.totalorder %s62, %s63
    %p77 = scmp.eq.s32.totalorder %s13, 1
    %p78 = por %p76, %p77
    %p80 = scmp.ne.s32.totalorder %s63, %s79
    %p81 = scmp.eq.s32.totalorder %s13, 0
    %p82 = por %p80, %p81
    %p83 = scmp.le.s32.totalorder 1, %s7
    %p84 = scmp.lt.s32.totalorder %s7, 3
    %p85 = pnand %p83, %p84
    %p86 = pneg %p85
    // Predicated region
    $region9: #{tpu_custom_call.1} parent=5 // pred_check
      _
    $region10: #{tpu_custom_call.1} parent=5 // pred_check_branch
      %88 = sbr.rel (%p85) target = $region12
    $region11: #{tpu_custom_call.1} parent=5 // pred_region
      %s89 = ssub.s32 %s7, 1
    $region12: #{tpu_custom_call.1} parent=5 // pred_fallthru
      _
    %p90 = scmp.lt.s32.totalorder %s7, 2
    // Predicated region
    $region13: #{tpu_custom_call.1} parent=5 // pred_check
      %p91 = pneg %p90
    $region14: #{tpu_custom_call.1} parent=5 // pred_check_branch
      %93 = sbr.rel (%p91) target = $region16
    $region15: #{tpu_custom_call.1} parent=5 // pred_region
      // Predicated region
      $region17: #{tpu_custom_call.1} parent=15 // pred_check
        %p94 = pneg %p41
      $region18: #{tpu_custom_call.1} parent=15 // pred_check_branch
        %96 = sbr.rel (%p94) target = $region20
      $region19: #{tpu_custom_call.1} parent=15 // pred_region
        %s97 = smul.u32 16, %s15
        %p98 = scmp.lt.s32.totalorder %s14, 1
        %s99 = scalar_select %p98, %s14, 1
        %p100 = scmp.lt.s32.totalorder %s97, 15
        %s101 = scalar_select %p100, %s97, 15
        %s102 = smul.addr %s101, 2
        %s103 = smul.addr %s99, 32
        %s104 = sadd.s32 %s102, %s103
        %s105 = smul.addr %s104, 8
        %s106 = scalar_lea.vmem %s0, %s105
        %s107 = smul.u32 16, %s15
      $region20: #{tpu_custom_call.1} parent=15 // pred_fallthru
        _
    $region16: #{tpu_custom_call.1} parent=5 // pred_fallthru
      _
    %p108 = scmp.le.s32.totalorder 1, %s7
    %p109 = scmp.lt.s32.totalorder %s7, 3
    %p110 = pnand %p108, %p109
    %p111 = pneg %p110
    // Predicated region
    $region21: #{tpu_custom_call.1} parent=5 // pred_check
      _
    $region22: #{tpu_custom_call.1} parent=5 // pred_check_branch
      %113 = sbr.rel (%p110) target = $region24
    $region23: #{tpu_custom_call.1} parent=5 // pred_region
      %s114 = ssub.s32 %s7, 1
      %s115 = smul.u32 16, %s17
      %p116 = scmp.lt.s32.totalorder %s16, 1
      %s117 = scalar_select %p116, %s16, 1
      %p118 = scmp.lt.s32.totalorder %s115, 15
      %s119 = scalar_select %p118, %s115, 15
      %s120 = smul.addr %s119, 2
      %s121 = smul.addr %s117, 32
      %s122 = sadd.s32 %s120, %s121
      %s123 = smul.addr %s122, 8
      %s124 = scalar_lea.vmem %s0, %s123
      %p125 = pneg %p47
      %p126 = pneg %p44
      %p127 = pneg %p75
      %p128 = pneg %p72
      %s129 = smul.u32 8, %s17
      %p130 = scmp.lt.s32.totalorder %s16, 1
      %s131 = scalar_select %p130, %s16, 1
      %p132 = scmp.lt.s32.totalorder %s129, 7
      %s133 = scalar_select %p132, %s129, 7
      %s134 = smul.addr %s131, 8
      %s135 = sadd.s32 %s133, %s134
      %s136 = smul.addr %s135, 8
      %s137 = scalar_lea.vmem %s1, %s136
      %s138 = smul.u32 16, %s17
      %p139 = scmp.lt.s32.totalorder %s16, 1
      %s140 = scalar_select %p139, %s16, 1
      %p141 = scmp.lt.s32.totalorder %s138, 15
      %s142 = scalar_select %p141, %s138, 15
      %s143 = smul.addr %s142, 2
      %s144 = smul.addr %s140, 32
      %s145 = sadd.s32 %s143, %s144
      %s146 = smul.addr %s145, 8
      %s147 = scalar_lea.vmem %s0, %s146
      %s148 = smul.u32 16, %s17
      %s149 = smul.u32 8, %s17
      %p150 = scmp.lt.s32.totalorder %s16, 1
      %s151 = scalar_select %p150, %s16, 1
      %p152 = scmp.lt.s32.totalorder %s149, 7
      %s153 = scalar_select %p152, %s149, 7
      %s154 = smul.addr %s151, 8
      %s155 = sadd.s32 %s153, %s154
      %s156 = smul.addr %s155, 8
      %s157 = scalar_lea.vmem %s1, %s156
      %s158 = smul.u32 8, %s17
      %v159 = vld [vmem:[%s147] sm:$0xff]
      %v160 = vld [vmem:[%s147 + $0x8] sm:$0xff]
      %v161 = vld [vmem:[%s147 + $0x10] sm:$0xff]
      %v162 = vld [vmem:[%s147 + $0x18] sm:$0xff]
      %v163 = vld [vmem:[%s147 + $0x20] sm:$0xff]
      %v164 = vld [vmem:[%s147 + $0x28] sm:$0xff]
      %v165 = vld [vmem:[%s147 + $0x30] sm:$0xff]
      %v166 = vld [vmem:[%s147 + $0x38] sm:$0xff]
      %v167 = vld [vmem:[%s147 + $0x40] sm:$0xff]
      %v168 = vld [vmem:[%s147 + $0x48] sm:$0xff]
      %v169 = vld [vmem:[%s147 + $0x50] sm:$0xff]
      %v170 = vld [vmem:[%s147 + $0x58] sm:$0xff]
      %v171 = vld [vmem:[%s147 + $0x60] sm:$0xff]
      %v172 = vld [vmem:[%s147 + $0x68] sm:$0xff]
      %v173 = vld [vmem:[%s147 + $0x70] sm:$0xff]
      %v174 = vld [vmem:[%s147 + $0x78] sm:$0xff]
      %v175 = vld [vmem:[%s147 + $0x80] sm:$0xff]
      %v176 = vld [vmem:[%s147 + $0x88] sm:$0xff]
      %v177 = vld [vmem:[%s147 + $0x90] sm:$0xff]
      %v178 = vld [vmem:[%s147 + $0x98] sm:$0xff]
      %v179 = vld [vmem:[%s147 + $0xa0] sm:$0xff]
      %v180 = vld [vmem:[%s147 + $0xa8] sm:$0xff]
      %v181 = vld [vmem:[%s147 + $0xb0] sm:$0xff]
      %v182 = vld [vmem:[%s147 + $0xb8] sm:$0xff]
      %v183 = vld [vmem:[%s147 + $0xc0] sm:$0xff]
      %v184 = vld [vmem:[%s147 + $0xc8] sm:$0xff]
      %v185 = vld [vmem:[%s147 + $0xd0] sm:$0xff]
      %v186 = vld [vmem:[%s147 + $0xd8] sm:$0xff]
      %v187 = vld [vmem:[%s147 + $0xe0] sm:$0xff]
      %v188 = vld [vmem:[%s147 + $0xe8] sm:$0xff]
      %v189 = vld [vmem:[%s147 + $0xf0] sm:$0xff]
      %v190 = vld [vmem:[%s147 + $0xf8] sm:$0xff]
      %v191 = vmax.f32 %v159, %v161
      %v192 = vmax.f32 %v160, %v162
      %v193 = vmax.f32 %v163, %v165
      %v194 = vmax.f32 %v164, %v166
      %v195 = vmax.f32 %v167, %v169
      %v196 = vmax.f32 %v168, %v170
      %v197 = vmax.f32 %v171, %v173
      %v198 = vmax.f32 %v172, %v174
      %v199 = vmax.f32 %v175, %v177
      %v200 = vmax.f32 %v176, %v178
      %v201 = vmax.f32 %v179, %v181
      %v202 = vmax.f32 %v180, %v182
      %v203 = vmax.f32 %v183, %v185
      %v204 = vmax.f32 %v184, %v186
      %v205 = vmax.f32 %v187, %v189
      %v206 = vmax.f32 %v188, %v190
      %v223 = vcombine.high %v191, %v191
      %v225 = vunpack.c.l.s4 1983009808
      %v226 = vunpack.c.0.s8 %v225
      %v227 = vlaneseq
      %v228 = vshrl.u32 %v227, 7
      %v229 = vsub.s32 %v226, %v228
      %v230 = vrot.slane %v191, %v229
      %v232 = vunpack.c.l.s4 1983009808
      %v233 = vunpack.c.0.s8 %v232
      %v234 = vlaneseq
      %v235 = vshrl.u32 %v234, 7
      %v236 = vsub.s32 %v233, %v235
      %v237 = vrot.slane %v223, %v236
      %v238 = vcombine.high %v230, %v230
      %v239 = vcombine.high %v237, %v237
      %v240 = vcombine.high %v192, %v192
      %v242 = vunpack.c.l.s4 1983009808
      %v243 = vunpack.c.0.s8 %v242
      %v244 = vlaneseq
      %v245 = vshrl.u32 %v244, 7
      %v246 = vsub.s32 %v243, %v245
      %v247 = vrot.slane %v192, %v246
      %v249 = vunpack.c.l.s4 1983009808
      %v250 = vunpack.c.0.s8 %v249
      %v251 = vlaneseq
      %v252 = vshrl.u32 %v251, 7
      %v253 = vsub.s32 %v250, %v252
      %v254 = vrot.slane %v240, %v253
      %v255 = vcombine.high %v247, %v247
      %v256 = vcombine.high %v254, %v254
      %v257 = vcombine.high %v193, %v193
      %v259 = vunpack.c.l.s4 1983009808
      %v260 = vunpack.c.0.s8 %v259
      %v261 = vlaneseq
      %v262 = vshrl.u32 %v261, 7
      %v263 = vsub.s32 %v260, %v262
      %v264 = vrot.slane %v193, %v263
      %v266 = vunpack.c.l.s4 1983009808
      %v267 = vunpack.c.0.s8 %v266
      %v268 = vlaneseq
      %v269 = vshrl.u32 %v268, 7
      %v270 = vsub.s32 %v267, %v269
      %v271 = vrot.slane %v257, %v270
      %v272 = vcombine.high %v264, %v264
      %v273 = vcombine.high %v271, %v271
      %v274 = vcombine.high %v194, %v194
      %v276 = vunpack.c.l.s4 1983009808
      %v277 = vunpack.c.0.s8 %v276
      %v278 = vlaneseq
      %v279 = vshrl.u32 %v278, 7
      %v280 = vsub.s32 %v277, %v279
      %v281 = vrot.slane %v194, %v280
      %v283 = vunpack.c.l.s4 1983009808
      %v284 = vunpack.c.0.s8 %v283
      %v285 = vlaneseq
      %v286 = vshrl.u32 %v285, 7
      %v287 = vsub.s32 %v284, %v286
      %v288 = vrot.slane %v274, %v287
      %v289 = vcombine.high %v281, %v281
      %v290 = vcombine.high %v288, %v288
      %v291 = vcombine.high %v195, %v195
      %v293 = vunpack.c.l.s4 1983009808
      %v294 = vunpack.c.0.s8 %v293
      %v295 = vlaneseq
      %v296 = vshrl.u32 %v295, 7
      %v297 = vsub.s32 %v294, %v296
      %v298 = vrot.slane %v195, %v297
      %v300 = vunpack.c.l.s4 1983009808
      %v301 = vunpack.c.0.s8 %v300
      %v302 = vlaneseq
      %v303 = vshrl.u32 %v302, 7
      %v304 = vsub.s32 %v301, %v303
      %v305 = vrot.slane %v291, %v304
      %v306 = vcombine.high %v298, %v298
      %v307 = vcombine.high %v305, %v305
      %v308 = vcombine.high %v196, %v196
      %v310 = vunpack.c.l.s4 1983009808
      %v311 = vunpack.c.0.s8 %v310
      %v312 = vlaneseq
      %v313 = vshrl.u32 %v312, 7
      %v314 = vsub.s32 %v311, %v313
      %v315 = vrot.slane %v196, %v314
      %v317 = vunpack.c.l.s4 1983009808
      %v318 = vunpack.c.0.s8 %v317
      %v319 = vlaneseq
      %v320 = vshrl.u32 %v319, 7
      %v321 = vsub.s32 %v318, %v320
      %v322 = vrot.slane %v308, %v321
      %v323 = vcombine.high %v315, %v315
      %v324 = vcombine.high %v322, %v322
      %v325 = vcombine.high %v197, %v197
      %v327 = vunpack.c.l.s4 1983009808
      %v328 = vunpack.c.0.s8 %v327
      %v329 = vlaneseq
      %v330 = vshrl.u32 %v329, 7
      %v331 = vsub.s32 %v328, %v330
      %v332 = vrot.slane %v197, %v331
      %v334 = vunpack.c.l.s4 1983009808
      %v335 = vunpack.c.0.s8 %v334
      %v336 = vlaneseq
      %v337 = vshrl.u32 %v336, 7
      %v338 = vsub.s32 %v335, %v337
      %v339 = vrot.slane %v325, %v338
      %v340 = vcombine.high %v332, %v332
      %v341 = vcombine.high %v339, %v339
      %v342 = vcombine.high %v198, %v198
      %v344 = vunpack.c.l.s4 1983009808
      %v345 = vunpack.c.0.s8 %v344
      %v346 = vlaneseq
      %v347 = vshrl.u32 %v346, 7
      %v348 = vsub.s32 %v345, %v347
      %v349 = vrot.slane %v198, %v348
      %v351 = vunpack.c.l.s4 1983009808
      %v352 = vunpack.c.0.s8 %v351
      %v353 = vlaneseq
      %v354 = vshrl.u32 %v353, 7
      %v355 = vsub.s32 %v352, %v354
      %v356 = vrot.slane %v342, %v355
      %v357 = vcombine.high %v349, %v349
      %v358 = vcombine.high %v356, %v356
      %v359 = vcombine.high %v199, %v199
      %v361 = vunpack.c.l.s4 1983009808
      %v362 = vunpack.c.0.s8 %v361
      %v363 = vlaneseq
      %v364 = vshrl.u32 %v363, 7
      %v365 = vsub.s32 %v362, %v364
      %v366 = vrot.slane %v199, %v365
      %v368 = vunpack.c.l.s4 1983009808
      %v369 = vunpack.c.0.s8 %v368
      %v370 = vlaneseq
      %v371 = vshrl.u32 %v370, 7
      %v372 = vsub.s32 %v369, %v371
      %v373 = vrot.slane %v359, %v372
      %v374 = vcombine.high %v366, %v366
      %v375 = vcombine.high %v373, %v373
      %v376 = vcombine.high %v200, %v200
      %v378 = vunpack.c.l.s4 1983009808
      %v379 = vunpack.c.0.s8 %v378
      %v380 = vlaneseq
      %v381 = vshrl.u32 %v380, 7
      %v382 = vsub.s32 %v379, %v381
      %v383 = vrot.slane %v200, %v382
      %v385 = vunpack.c.l.s4 1983009808
      %v386 = vunpack.c.0.s8 %v385
      %v387 = vlaneseq
      %v388 = vshrl.u32 %v387, 7
      %v389 = vsub.s32 %v386, %v388
      %v390 = vrot.slane %v376, %v389
      %v391 = vcombine.high %v383, %v383
      %v392 = vcombine.high %v390, %v390
      %v393 = vcombine.high %v201, %v201
      %v395 = vunpack.c.l.s4 1983009808
      %v396 = vunpack.c.0.s8 %v395
      %v397 = vlaneseq
      %v398 = vshrl.u32 %v397, 7
      %v399 = vsub.s32 %v396, %v398
      %v400 = vrot.slane %v201, %v399
      %v402 = vunpack.c.l.s4 1983009808
      %v403 = vunpack.c.0.s8 %v402
      %v404 = vlaneseq
      %v405 = vshrl.u32 %v404, 7
      %v406 = vsub.s32 %v403, %v405
      %v407 = vrot.slane %v393, %v406
      %v408 = vcombine.high %v400, %v400
      %v409 = vcombine.high %v407, %v407
      %v410 = vcombine.high %v202, %v202
      %v412 = vunpack.c.l.s4 1983009808
      %v413 = vunpack.c.0.s8 %v412
      %v414 = vlaneseq
      %v415 = vshrl.u32 %v414, 7
      %v416 = vsub.s32 %v413, %v415
      %v417 = vrot.slane %v202, %v416
      %v419 = vunpack.c.l.s4 1983009808
      %v420 = vunpack.c.0.s8 %v419
      %v421 = vlaneseq
      %v422 = vshrl.u32 %v421, 7
      %v423 = vsub.s32 %v420, %v422
      %v424 = vrot.slane %v410, %v423
      %v425 = vcombine.high %v417, %v417
      %v426 = vcombine.high %v424, %v424
      %v427 = vcombine.high %v203, %v203
      %v429 = vunpack.c.l.s4 1983009808
      %v430 = vunpack.c.0.s8 %v429
      %v431 = vlaneseq
      %v432 = vshrl.u32 %v431, 7
      %v433 = vsub.s32 %v430, %v432
      %v434 = vrot.slane %v203, %v433
      %v436 = vunpack.c.l.s4 1983009808
      %v437 = vunpack.c.0.s8 %v436
      %v438 = vlaneseq
      %v439 = vshrl.u32 %v438, 7
      %v440 = vsub.s32 %v437, %v439
      %v441 = vrot.slane %v427, %v440
      %v442 = vcombine.high %v434, %v434
      %v443 = vcombine.high %v441, %v441
      %v444 = vcombine.high %v204, %v204
      %v446 = vunpack.c.l.s4 1983009808
      %v447 = vunpack.c.0.s8 %v446
      %v448 = vlaneseq
      %v449 = vshrl.u32 %v448, 7
      %v450 = vsub.s32 %v447, %v449
      %v451 = vrot.slane %v204, %v450
      %v453 = vunpack.c.l.s4 1983009808
      %v454 = vunpack.c.0.s8 %v453
      %v455 = vlaneseq
      %v456 = vshrl.u32 %v455, 7
      %v457 = vsub.s32 %v454, %v456
      %v458 = vrot.slane %v444, %v457
      %v459 = vcombine.high %v451, %v451
      %v460 = vcombine.high %v458, %v458
      %v461 = vcombine.high %v205, %v205
      %v463 = vunpack.c.l.s4 1983009808
      %v464 = vunpack.c.0.s8 %v463
      %v465 = vlaneseq
      %v466 = vshrl.u32 %v465, 7
      %v467 = vsub.s32 %v464, %v466
      %v468 = vrot.slane %v205, %v467
      %v470 = vunpack.c.l.s4 1983009808
      %v471 = vunpack.c.0.s8 %v470
      %v472 = vlaneseq
      %v473 = vshrl.u32 %v472, 7
      %v474 = vsub.s32 %v471, %v473
      %v475 = vrot.slane %v461, %v474
      %v476 = vcombine.high %v468, %v468
      %v477 = vcombine.high %v475, %v475
      %v478 = vcombine.high %v206, %v206
      %v480 = vunpack.c.l.s4 1983009808
      %v481 = vunpack.c.0.s8 %v480
      %v482 = vlaneseq
      %v483 = vshrl.u32 %v482, 7
      %v484 = vsub.s32 %v481, %v483
      %v485 = vrot.slane %v206, %v484
      %v487 = vunpack.c.l.s4 1983009808
      %v488 = vunpack.c.0.s8 %v487
      %v489 = vlaneseq
      %v490 = vshrl.u32 %v489, 7
      %v491 = vsub.s32 %v488, %v490
      %v492 = vrot.slane %v478, %v491
      %v493 = vcombine.high %v485, %v485
      %v494 = vcombine.high %v492, %v492
      %v559 = vrot.slane %v230, 7
      %v560 = vrot.slane %v559, 2
      %v561 = vrot.slane %v238, 7
      %v562 = vrot.slane %v561, 2
      %v563 = vrot.slane %v237, 7
      %v564 = vrot.slane %v563, 2
      %v565 = vrot.slane %v239, 7
      %v566 = vrot.slane %v565, 2
      %v567 = vrot.slane %v247, 7
      %v568 = vrot.slane %v567, 2
      %v569 = vrot.slane %v255, 7
      %v570 = vrot.slane %v569, 2
      %v571 = vrot.slane %v254, 7
      %v572 = vrot.slane %v571, 2
      %v573 = vrot.slane %v256, 7
      %v574 = vrot.slane %v573, 2
      %v575 = vrot.slane %v264, 7
      %v576 = vrot.slane %v575, 2
      %v577 = vrot.slane %v272, 7
      %v578 = vrot.slane %v577, 2
      %v579 = vrot.slane %v271, 7
      %v580 = vrot.slane %v579, 2
      %v581 = vrot.slane %v273, 7
      %v582 = vrot.slane %v581, 2
      %v583 = vrot.slane %v281, 7
      %v584 = vrot.slane %v583, 2
      %v585 = vrot.slane %v289, 7
      %v586 = vrot.slane %v585, 2
      %v587 = vrot.slane %v288, 7
      %v588 = vrot.slane %v587, 2
      %v589 = vrot.slane %v290, 7
      %v590 = vrot.slane %v589, 2
      %v591 = vrot.slane %v298, 7
      %v592 = vrot.slane %v591, 2
      %v593 = vrot.slane %v306, 7
      %v594 = vrot.slane %v593, 2
      %v595 = vrot.slane %v305, 7
      %v596 = vrot.slane %v595, 2
      %v597 = vrot.slane %v307, 7
      %v598 = vrot.slane %v597, 2
      %v599 = vrot.slane %v315, 7
      %v600 = vrot.slane %v599, 2
      %v601 = vrot.slane %v323, 7
      %v602 = vrot.slane %v601, 2
      %v603 = vrot.slane %v322, 7
      %v604 = vrot.slane %v603, 2
      %v605 = vrot.slane %v324, 7
      %v606 = vrot.slane %v605, 2
      %v607 = vrot.slane %v332, 7
      %v608 = vrot.slane %v607, 2
      %v609 = vrot.slane %v340, 7
      %v610 = vrot.slane %v609, 2
      %v611 = vrot.slane %v339, 7
      %v612 = vrot.slane %v611, 2
      %v613 = vrot.slane %v341, 7
      %v614 = vrot.slane %v613, 2
      %v615 = vrot.slane %v349, 7
      %v616 = vrot.slane %v615, 2
      %v617 = vrot.slane %v357, 7
      %v618 = vrot.slane %v617, 2
      %v619 = vrot.slane %v356, 7
      %v620 = vrot.slane %v619, 2
      %v621 = vrot.slane %v358, 7
      %v622 = vrot.slane %v621, 2
      %v623 = vrot.slane %v366, 7
      %v624 = vrot.slane %v623, 2
      %v625 = vrot.slane %v374, 7
      %v626 = vrot.slane %v625, 2
      %v627 = vrot.slane %v373, 7
      %v628 = vrot.slane %v627, 2
      %v629 = vrot.slane %v375, 7
      %v630 = vrot.slane %v629, 2
      %v631 = vrot.slane %v383, 7
      %v632 = vrot.slane %v631, 2
      %v633 = vrot.slane %v391, 7
      %v634 = vrot.slane %v633, 2
      %v635 = vrot.slane %v390, 7
      %v636 = vrot.slane %v635, 2
      %v637 = vrot.slane %v392, 7
      %v638 = vrot.slane %v637, 2
      %v639 = vrot.slane %v400, 7
      %v640 = vrot.slane %v639, 2
      %v641 = vrot.slane %v408, 7
      %v642 = vrot.slane %v641, 2
      %v643 = vrot.slane %v407, 7
      %v644 = vrot.slane %v643, 2
      %v645 = vrot.slane %v409, 7
      %v646 = vrot.slane %v645, 2
      %v647 = vrot.slane %v417, 7
      %v648 = vrot.slane %v647, 2
      %v649 = vrot.slane %v425, 7
      %v650 = vrot.slane %v649, 2
      %v651 = vrot.slane %v424, 7
      %v652 = vrot.slane %v651, 2
      %v653 = vrot.slane %v426, 7
      %v654 = vrot.slane %v653, 2
      %v655 = vrot.slane %v434, 7
      %v656 = vrot.slane %v655, 2
      %v657 = vrot.slane %v442, 7
      %v658 = vrot.slane %v657, 2
      %v659 = vrot.slane %v441, 7
      %v660 = vrot.slane %v659, 2
      %v661 = vrot.slane %v443, 7
      %v662 = vrot.slane %v661, 2
      %v663 = vrot.slane %v451, 7
      %v664 = vrot.slane %v663, 2
      %v665 = vrot.slane %v459, 7
      %v666 = vrot.slane %v665, 2
      %v667 = vrot.slane %v458, 7
      %v668 = vrot.slane %v667, 2
      %v669 = vrot.slane %v460, 7
      %v670 = vrot.slane %v669, 2
      %v671 = vrot.slane %v468, 7
      %v672 = vrot.slane %v671, 2
      %v673 = vrot.slane %v476, 7
      %v674 = vrot.slane %v673, 2
      %v675 = vrot.slane %v475, 7
      %v676 = vrot.slane %v675, 2
      %v677 = vrot.slane %v477, 7
      %v678 = vrot.slane %v677, 2
      %v679 = vrot.slane %v485, 7
      %v680 = vrot.slane %v679, 2
      %v681 = vrot.slane %v493, 7
      %v682 = vrot.slane %v681, 2
      %v683 = vrot.slane %v492, 7
      %v684 = vrot.slane %v683, 2
      %v685 = vrot.slane %v494, 7
      %v686 = vrot.slane %v685, 2
      %v751 = vmax.f32 %v230, %v560
      %v752 = vmax.f32 %v238, %v562
      %v753 = vmax.f32 %v237, %v564
      %v754 = vmax.f32 %v239, %v566
      %v755 = vmax.f32 %v247, %v568
      %v756 = vmax.f32 %v255, %v570
      %v757 = vmax.f32 %v254, %v572
      %v758 = vmax.f32 %v256, %v574
      %v759 = vmax.f32 %v264, %v576
      %v760 = vmax.f32 %v272, %v578
      %v761 = vmax.f32 %v271, %v580
      %v762 = vmax.f32 %v273, %v582
      %v763 = vmax.f32 %v281, %v584
      %v764 = vmax.f32 %v289, %v586
      %v765 = vmax.f32 %v288, %v588
      %v766 = vmax.f32 %v290, %v590
      %v767 = vmax.f32 %v298, %v592
      %v768 = vmax.f32 %v306, %v594
      %v769 = vmax.f32 %v305, %v596
      %v770 = vmax.f32 %v307, %v598
      %v771 = vmax.f32 %v315, %v600
      %v772 = vmax.f32 %v323, %v602
      %v773 = vmax.f32 %v322, %v604
      %v774 = vmax.f32 %v324, %v606
      %v775 = vmax.f32 %v332, %v608
      %v776 = vmax.f32 %v340, %v610
      %v777 = vmax.f32 %v339, %v612
      %v778 = vmax.f32 %v341, %v614
      %v779 = vmax.f32 %v349, %v616
      %v780 = vmax.f32 %v357, %v618
      %v781 = vmax.f32 %v356, %v620
      %v782 = vmax.f32 %v358, %v622
      %v783 = vmax.f32 %v366, %v624
      %v784 = vmax.f32 %v374, %v626
      %v785 = vmax.f32 %v373, %v628
      %v786 = vmax.f32 %v375, %v630
      %v787 = vmax.f32 %v383, %v632
      %v788 = vmax.f32 %v391, %v634
      %v789 = vmax.f32 %v390, %v636
      %v790 = vmax.f32 %v392, %v638
      %v791 = vmax.f32 %v400, %v640
      %v792 = vmax.f32 %v408, %v642
      %v793 = vmax.f32 %v407, %v644
      %v794 = vmax.f32 %v409, %v646
      %v795 = vmax.f32 %v417, %v648
      %v796 = vmax.f32 %v425, %v650
      %v797 = vmax.f32 %v424, %v652
      %v798 = vmax.f32 %v426, %v654
      %v799 = vmax.f32 %v434, %v656
      %v800 = vmax.f32 %v442, %v658
      %v801 = vmax.f32 %v441, %v660
      %v802 = vmax.f32 %v443, %v662
      %v803 = vmax.f32 %v451, %v664
      %v804 = vmax.f32 %v459, %v666
      %v805 = vmax.f32 %v458, %v668
      %v806 = vmax.f32 %v460, %v670
      %v807 = vmax.f32 %v468, %v672
      %v808 = vmax.f32 %v476, %v674
      %v809 = vmax.f32 %v475, %v676
      %v810 = vmax.f32 %v477, %v678
      %v811 = vmax.f32 %v485, %v680
      %v812 = vmax.f32 %v493, %v682
      %v813 = vmax.f32 %v492, %v684
      %v814 = vmax.f32 %v494, %v686
      %v879 = vlaneseq
      %v880 = vshrl.u32 %v879, 7
      %v881 = vsub.s32 0, %v880
      %v882 = vrot.slane %v751, %v881
      %v883 = vlaneseq
      %v884 = vshrl.u32 %v883, 7
      %v885 = vsub.s32 0, %v884
      %v886 = vrot.slane %v752, %v885
      %v887 = vlaneseq
      %v888 = vshrl.u32 %v887, 7
      %v889 = vsub.s32 0, %v888
      %v890 = vrot.slane %v753, %v889
      %v891 = vlaneseq
      %v892 = vshrl.u32 %v891, 7
      %v893 = vsub.s32 0, %v892
      %v894 = vrot.slane %v754, %v893
      %v895 = vlaneseq
      %v896 = vshrl.u32 %v895, 7
      %v897 = vsub.s32 0, %v896
      %v898 = vrot.slane %v755, %v897
      %v899 = vlaneseq
      %v900 = vshrl.u32 %v899, 7
      %v901 = vsub.s32 0, %v900
      %v902 = vrot.slane %v756, %v901
      %v903 = vlaneseq
      %v904 = vshrl.u32 %v903, 7
      %v905 = vsub.s32 0, %v904
      %v906 = vrot.slane %v757, %v905
      %v907 = vlaneseq
      %v908 = vshrl.u32 %v907, 7
      %v909 = vsub.s32 0, %v908
      %v910 = vrot.slane %v758, %v909
      %v911 = vlaneseq
      %v912 = vshrl.u32 %v911, 7
      %v913 = vsub.s32 0, %v912
      %v914 = vrot.slane %v759, %v913
      %v915 = vlaneseq
      %v916 = vshrl.u32 %v915, 7
      %v917 = vsub.s32 0, %v916
      %v918 = vrot.slane %v760, %v917
      %v919 = vlaneseq
      %v920 = vshrl.u32 %v919, 7
      %v921 = vsub.s32 0, %v920
      %v922 = vrot.slane %v761, %v921
      %v923 = vlaneseq
      %v924 = vshrl.u32 %v923, 7
      %v925 = vsub.s32 0, %v924
      %v926 = vrot.slane %v762, %v925
      %v927 = vlaneseq
      %v928 = vshrl.u32 %v927, 7
      %v929 = vsub.s32 0, %v928
      %v930 = vrot.slane %v763, %v929
      %v931 = vlaneseq
      %v932 = vshrl.u32 %v931, 7
      %v933 = vsub.s32 0, %v932
      %v934 = vrot.slane %v764, %v933
      %v935 = vlaneseq
      %v936 = vshrl.u32 %v935, 7
      %v937 = vsub.s32 0, %v936
      %v938 = vrot.slane %v765, %v937
      %v939 = vlaneseq
      %v940 = vshrl.u32 %v939, 7
      %v941 = vsub.s32 0, %v940
      %v942 = vrot.slane %v766, %v941
      %v943 = vlaneseq
      %v944 = vshrl.u32 %v943, 7
      %v945 = vsub.s32 0, %v944
      %v946 = vrot.slane %v767, %v945
      %v947 = vlaneseq
      %v948 = vshrl.u32 %v947, 7
      %v949 = vsub.s32 0, %v948
      %v950 = vrot.slane %v768, %v949
      %v951 = vlaneseq
      %v952 = vshrl.u32 %v951, 7
      %v953 = vsub.s32 0, %v952
      %v954 = vrot.slane %v769, %v953
      %v955 = vlaneseq
      %v956 = vshrl.u32 %v955, 7
      %v957 = vsub.s32 0, %v956
      %v958 = vrot.slane %v770, %v957
      %v959 = vlaneseq
      %v960 = vshrl.u32 %v959, 7
      %v961 = vsub.s32 0, %v960
      %v962 = vrot.slane %v771, %v961
      %v963 = vlaneseq
      %v964 = vshrl.u32 %v963, 7
      %v965 = vsub.s32 0, %v964
      %v966 = vrot.slane %v772, %v965
      %v967 = vlaneseq
      %v968 = vshrl.u32 %v967, 7
      %v969 = vsub.s32 0, %v968
      %v970 = vrot.slane %v773, %v969
      %v971 = vlaneseq
      %v972 = vshrl.u32 %v971, 7
      %v973 = vsub.s32 0, %v972
      %v974 = vrot.slane %v774, %v973
      %v975 = vlaneseq
      %v976 = vshrl.u32 %v975, 7
      %v977 = vsub.s32 0, %v976
      %v978 = vrot.slane %v775, %v977
      %v979 = vlaneseq
      %v980 = vshrl.u32 %v979, 7
      %v981 = vsub.s32 0, %v980
      %v982 = vrot.slane %v776, %v981
      %v983 = vlaneseq
      %v984 = vshrl.u32 %v983, 7
      %v985 = vsub.s32 0, %v984
      %v986 = vrot.slane %v777, %v985
      %v987 = vlaneseq
      %v988 = vshrl.u32 %v987, 7
      %v989 = vsub.s32 0, %v988
      %v990 = vrot.slane %v778, %v989
      %v991 = vlaneseq
      %v992 = vshrl.u32 %v991, 7
      %v993 = vsub.s32 0, %v992
      %v994 = vrot.slane %v779, %v993
      %v995 = vlaneseq
      %v996 = vshrl.u32 %v995, 7
      %v997 = vsub.s32 0, %v996
      %v998 = vrot.slane %v780, %v997
      %v999 = vlaneseq
      %v1000 = vshrl.u32 %v999, 7
      %v1001 = vsub.s32 0, %v1000
      %v1002 = vrot.slane %v781, %v1001
      %v1003 = vlaneseq
      %v1004 = vshrl.u32 %v1003, 7
      %v1005 = vsub.s32 0, %v1004
      %v1006 = vrot.slane %v782, %v1005
      %v1007 = vlaneseq
      %v1008 = vshrl.u32 %v1007, 7
      %v1009 = vsub.s32 0, %v1008
      %v1010 = vrot.slane %v783, %v1009
      %v1011 = vlaneseq
      %v1012 = vshrl.u32 %v1011, 7
      %v1013 = vsub.s32 0, %v1012
      %v1014 = vrot.slane %v784, %v1013
      %v1015 = vlaneseq
      %v1016 = vshrl.u32 %v1015, 7
      %v1017 = vsub.s32 0, %v1016
      %v1018 = vrot.slane %v785, %v1017
      %v1019 = vlaneseq
      %v1020 = vshrl.u32 %v1019, 7
      %v1021 = vsub.s32 0, %v1020
      %v1022 = vrot.slane %v786, %v1021
      %v1023 = vlaneseq
      %v1024 = vshrl.u32 %v1023, 7
      %v1025 = vsub.s32 0, %v1024
      %v1026 = vrot.slane %v787, %v1025
      %v1027 = vlaneseq
      %v1028 = vshrl.u32 %v1027, 7
      %v1029 = vsub.s32 0, %v1028
      %v1030 = vrot.slane %v788, %v1029
      %v1031 = vlaneseq
      %v1032 = vshrl.u32 %v1031, 7
      %v1033 = vsub.s32 0, %v1032
      %v1034 = vrot.slane %v789, %v1033
      %v1035 = vlaneseq
      %v1036 = vshrl.u32 %v1035, 7
      %v1037 = vsub.s32 0, %v1036
      %v1038 = vrot.slane %v790, %v1037
      %v1039 = vlaneseq
      %v1040 = vshrl.u32 %v1039, 7
      %v1041 = vsub.s32 0, %v1040
      %v1042 = vrot.slane %v791, %v1041
      %v1043 = vlaneseq
      %v1044 = vshrl.u32 %v1043, 7
      %v1045 = vsub.s32 0, %v1044
      %v1046 = vrot.slane %v792, %v1045
      %v1047 = vlaneseq
      %v1048 = vshrl.u32 %v1047, 7
      %v1049 = vsub.s32 0, %v1048
      %v1050 = vrot.slane %v793, %v1049
      %v1051 = vlaneseq
      %v1052 = vshrl.u32 %v1051, 7
      %v1053 = vsub.s32 0, %v1052
      %v1054 = vrot.slane %v794, %v1053
      %v1055 = vlaneseq
      %v1056 = vshrl.u32 %v1055, 7
      %v1057 = vsub.s32 0, %v1056
      %v1058 = vrot.slane %v795, %v1057
      %v1059 = vlaneseq
      %v1060 = vshrl.u32 %v1059, 7
      %v1061 = vsub.s32 0, %v1060
      %v1062 = vrot.slane %v796, %v1061
      %v1063 = vlaneseq
      %v1064 = vshrl.u32 %v1063, 7
      %v1065 = vsub.s32 0, %v1064
      %v1066 = vrot.slane %v797, %v1065
      %v1067 = vlaneseq
      %v1068 = vshrl.u32 %v1067, 7
      %v1069 = vsub.s32 0, %v1068
      %v1070 = vrot.slane %v798, %v1069
      %v1071 = vlaneseq
      %v1072 = vshrl.u32 %v1071, 7
      %v1073 = vsub.s32 0, %v1072
      %v1074 = vrot.slane %v799, %v1073
      %v1075 = vlaneseq
      %v1076 = vshrl.u32 %v1075, 7
      %v1077 = vsub.s32 0, %v1076
      %v1078 = vrot.slane %v800, %v1077
      %v1079 = vlaneseq
      %v1080 = vshrl.u32 %v1079, 7
      %v1081 = vsub.s32 0, %v1080
      %v1082 = vrot.slane %v801, %v1081
      %v1083 = vlaneseq
      %v1084 = vshrl.u32 %v1083, 7
      %v1085 = vsub.s32 0, %v1084
      %v1086 = vrot.slane %v802, %v1085
      %v1087 = vlaneseq
      %v1088 = vshrl.u32 %v1087, 7
      %v1089 = vsub.s32 0, %v1088
      %v1090 = vrot.slane %v803, %v1089
      %v1091 = vlaneseq
      %v1092 = vshrl.u32 %v1091, 7
      %v1093 = vsub.s32 0, %v1092
      %v1094 = vrot.slane %v804, %v1093
      %v1095 = vlaneseq
      %v1096 = vshrl.u32 %v1095, 7
      %v1097 = vsub.s32 0, %v1096
      %v1098 = vrot.slane %v805, %v1097
      %v1099 = vlaneseq
      %v1100 = vshrl.u32 %v1099, 7
      %v1101 = vsub.s32 0, %v1100
      %v1102 = vrot.slane %v806, %v1101
      %v1103 = vlaneseq
      %v1104 = vshrl.u32 %v1103, 7
      %v1105 = vsub.s32 0, %v1104
      %v1106 = vrot.slane %v807, %v1105
      %v1107 = vlaneseq
      %v1108 = vshrl.u32 %v1107, 7
      %v1109 = vsub.s32 0, %v1108
      %v1110 = vrot.slane %v808, %v1109
      %v1111 = vlaneseq
      %v1112 = vshrl.u32 %v1111, 7
      %v1113 = vsub.s32 0, %v1112
      %v1114 = vrot.slane %v809, %v1113
      %v1115 = vlaneseq
      %v1116 = vshrl.u32 %v1115, 7
      %v1117 = vsub.s32 0, %v1116
      %v1118 = vrot.slane %v810, %v1117
      %v1119 = vlaneseq
      %v1120 = vshrl.u32 %v1119, 7
      %v1121 = vsub.s32 0, %v1120
      %v1122 = vrot.slane %v811, %v1121
      %v1123 = vlaneseq
      %v1124 = vshrl.u32 %v1123, 7
      %v1125 = vsub.s32 0, %v1124
      %v1126 = vrot.slane %v812, %v1125
      %v1127 = vlaneseq
      %v1128 = vshrl.u32 %v1127, 7
      %v1129 = vsub.s32 0, %v1128
      %v1130 = vrot.slane %v813, %v1129
      %v1131 = vlaneseq
      %v1132 = vshrl.u32 %v1131, 7
      %v1133 = vsub.s32 0, %v1132
      %v1134 = vrot.slane %v814, %v1133
      %vm1135 = vcmask 1041409
      %v1136 = vsel %vm1135, %v886, %v882
      %vm1137 = vcmask 1042434
      %v1138 = vsel %vm1137, %v890, %v1136
      %vm1139 = vcmask 1043459
      %v1140 = vsel %vm1139, %v894, %v1138
      %vm1141 = vcmask 1044484
      %v1142 = vsel %vm1141, %v898, %v1140
      %vm1143 = vcmask 1045509
      %v1144 = vsel %vm1143, %v902, %v1142
      %vm1145 = vcmask 1046534
      %v1146 = vsel %vm1145, %v906, %v1144
      %vm1147 = vcmask 1047559
      %v1148 = vsel %vm1147, %v910, %v1146
      %v1149 = vsel %vm1135, %v918, %v914
      %v1150 = vsel %vm1137, %v922, %v1149
      %v1151 = vsel %vm1139, %v926, %v1150
      %v1152 = vsel %vm1141, %v930, %v1151
      %v1153 = vsel %vm1143, %v934, %v1152
      %v1154 = vsel %vm1145, %v938, %v1153
      %v1155 = vsel %vm1147, %v942, %v1154
      %v1156 = vsel %vm1135, %v950, %v946
      %v1157 = vsel %vm1137, %v954, %v1156
      %v1158 = vsel %vm1139, %v958, %v1157
      %v1159 = vsel %vm1141, %v962, %v1158
      %v1160 = vsel %vm1143, %v966, %v1159
      %v1161 = vsel %vm1145, %v970, %v1160
      %v1162 = vsel %vm1147, %v974, %v1161
      %v1163 = vsel %vm1135, %v982, %v978
      %v1164 = vsel %vm1137, %v986, %v1163
      %v1165 = vsel %vm1139, %v990, %v1164
      %v1166 = vsel %vm1141, %v994, %v1165
      %v1167 = vsel %vm1143, %v998, %v1166
      %v1168 = vsel %vm1145, %v1002, %v1167
      %v1169 = vsel %vm1147, %v1006, %v1168
      %v1170 = vsel %vm1135, %v1014, %v1010
      %v1171 = vsel %vm1137, %v1018, %v1170
      %v1172 = vsel %vm1139, %v1022, %v1171
      %v1173 = vsel %vm1141, %v1026, %v1172
      %v1174 = vsel %vm1143, %v1030, %v1173
      %v1175 = vsel %vm1145, %v1034, %v1174
      %v1176 = vsel %vm1147, %v1038, %v1175
      %v1177 = vsel %vm1135, %v1046, %v1042
      %v1178 = vsel %vm1137, %v1050, %v1177
      %v1179 = vsel %vm1139, %v1054, %v1178
      %v1180 = vsel %vm1141, %v1058, %v1179
      %v1181 = vsel %vm1143, %v1062, %v1180
      %v1182 = vsel %vm1145, %v1066, %v1181
      %v1183 = vsel %vm1147, %v1070, %v1182
      %v1184 = vsel %vm1135, %v1078, %v1074
      %v1185 = vsel %vm1137, %v1082, %v1184
      %v1186 = vsel %vm1139, %v1086, %v1185
      %v1187 = vsel %vm1141, %v1090, %v1186
      %v1188 = vsel %vm1143, %v1094, %v1187
      %v1189 = vsel %vm1145, %v1098, %v1188
      %v1190 = vsel %vm1147, %v1102, %v1189
      %v1191 = vsel %vm1135, %v1110, %v1106
      %v1192 = vsel %vm1137, %v1114, %v1191
      %v1193 = vsel %vm1139, %v1118, %v1192
      %v1194 = vsel %vm1141, %v1122, %v1193
      %v1195 = vsel %vm1143, %v1126, %v1194
      %v1196 = vsel %vm1145, %v1130, %v1195
      %v1197 = vsel %vm1147, %v1134, %v1196
      %vm1206 = vcmask 31744
      %1207 = vst.msk [vmem:[%s157] sm:$0xff] %vm1206, %v1148
      %1208 = vst.msk [vmem:[%s157 + $0x8] sm:$0xff] %vm1206, %v1155
      %1209 = vst.msk [vmem:[%s157 + $0x10] sm:$0xff] %vm1206, %v1162
      %1210 = vst.msk [vmem:[%s157 + $0x18] sm:$0xff] %vm1206, %v1169
      %1211 = vst.msk [vmem:[%s157 + $0x20] sm:$0xff] %vm1206, %v1176
      %1212 = vst.msk [vmem:[%s157 + $0x28] sm:$0xff] %vm1206, %v1183
      %1213 = vst.msk [vmem:[%s157 + $0x30] sm:$0xff] %vm1206, %v1190
      %1214 = vst.msk [vmem:[%s157 + $0x38] sm:$0xff] %vm1206, %v1197
      %s1215 = smul.u32 8, %s17
      %p1216 = scmp.lt.s32.totalorder %s16, 1
      %s1217 = scalar_select %p1216, %s16, 1
      %p1218 = scmp.lt.s32.totalorder %s1215, 7
      %s1219 = scalar_select %p1218, %s1215, 7
      %s1220 = smul.addr %s1217, 8
      %s1221 = sadd.s32 %s1219, %s1220
      %s1222 = smul.addr %s1221, 8
      %s1223 = scalar_lea.vmem %s1, %s1222
      // Predicated region
      $region25: #{tpu_custom_call.1} parent=23 // pred_check
        %p1224 = pneg %p72
      $region26: #{tpu_custom_call.1} parent=23 // pred_check_branch
        %1226 = sbr.rel (%p1224) target = $region28
      $region27: #{tpu_custom_call.1} parent=23 // pred_region
        %s1227 = smul.u32 8, %s17
      $region28: #{tpu_custom_call.1} parent=23 // pred_fallthru
        _
    $region24: #{tpu_custom_call.1} parent=5 // pred_fallthru
      _
    %p1228 = scmp.le.s32.totalorder 2, %s7
    // Predicated region
    $region29: #{tpu_custom_call.1} parent=5 // pred_check
      %p1229 = pneg %p1228
    $region30: #{tpu_custom_call.1} parent=5 // pred_check_branch
      %1231 = sbr.rel (%p1229) target = $region32
    $region31: #{tpu_custom_call.1} parent=5 // pred_region
      %s1232 = ssub.s32 %s7, 2
      // Predicated region
      $region33: #{tpu_custom_call.1} parent=31 // pred_check
        %p1233 = pneg %p78
      $region34: #{tpu_custom_call.1} parent=31 // pred_check_branch
        %1235 = sbr.rel (%p1233) target = $region36
      $region35: #{tpu_custom_call.1} parent=31 // pred_region
        %s1236 = smul.u32 8, %s19
        %p1237 = scmp.lt.s32.totalorder %s18, 1
        %s1238 = scalar_select %p1237, %s18, 1
        %p1239 = scmp.lt.s32.totalorder %s1236, 7
        %s1240 = scalar_select %p1239, %s1236, 7
        %s1241 = smul.addr %s1238, 8
        %s1242 = sadd.s32 %s1240, %s1241
        %s1243 = smul.addr %s1242, 8
        %s1244 = scalar_lea.vmem %s1, %s1243
      $region36: #{tpu_custom_call.1} parent=31 // pred_fallthru
        _
    $region32: #{tpu_custom_call.1} parent=5 // pred_fallthru
      _
  $region6: #{tpu_custom_call.1} parent=0 // loop_footer
    %s11 = sadd.s32 1, %s7
  $region7: #{tpu_custom_call.1} parent=0 // loop_footer_branch
    %6 = sbr.rel target = $region3
  $region8: #{tpu_custom_call.1} parent=0 // loop_exit
    _

</llo_original>
